<compile_context>
chip_gen: v7x
topology: tpu7x:2x2x1
jax: 0.10.0
libtpu: 0.0.40
codegen_flags: <defaults>
</compile_context>

<pallas_src>
import functools

import jax
import jax.numpy as jnp
from jax.experimental import pallas as pl
from jax.experimental.pallas import tpu as pltpu

LANES = 128


def mlp_kernel(x_ref, w1_ref, b1_ref, w2_ref, b2_ref, o_ref, *, hidden):
    # x_ref / o_ref: (tile_r, 128) f32 in VMEM (lane-dense).
    # w1_ref, b1_ref, w2_ref: (H,) f32 in SMEM;  b2_ref: (1,) f32 in SMEM.
    x = x_ref[...]
    acc = jnp.full_like(x, b2_ref[0])
    # Static, fully-unrolled loop over the (small) hidden dimension: pure VPU work,
    # each step is one scalar-broadcast FMA + ReLU + scalar-broadcast FMA.
    for h in range(hidden):
        acc = acc + jnp.maximum(x * w1_ref[h] + b1_ref[h], 0.0) * w2_ref[h]
    o_ref[...] = acc.astype(o_ref.dtype)


def net_forward(x, w1, b1, w2, b2, *, tile_r=1024):
    """Forward pass of Net.

    x:  (N, 1) f32
    w1: (H,)  hidden weight (Linear(1,H).weight squeezed)
    b1: (H,)  hidden bias
    w2: (H,)  output weight (Linear(H,1).weight squeezed)
    b2: (1,)  output bias
    returns (N, 1) f32
    """
    N = x.shape[0]
    H = w1.shape[0]

    # Lane-dense layout: flatten to (N,), pad to R * 128, view as (R, 128).
    r_needed = -(-N // LANES)
    # Tile rows: multiple of 8 (sublane), capped at what the data actually needs.
    tile_r = max(8, min(tile_r, ((r_needed + 7) // 8) * 8))
    num_tiles = -(-r_needed // tile_r)
    R = num_tiles * tile_r
    Np = R * LANES

    x_pad = jnp.pad(x.reshape(N), (0, Np - N)).reshape(R, LANES)

    kernel = functools.partial(mlp_kernel, hidden=H)
    smem_spec = pl.BlockSpec(memory_space=pltpu.MemorySpace.SMEM)

    out2 = pl.pallas_call(
        kernel,
        out_shape=jax.ShapeDtypeStruct((R, LANES), jnp.float32),
        grid_spec=pltpu.PrefetchScalarGridSpec(
            num_scalar_prefetch=0,
            grid=(num_tiles,),
            in_specs=[
                pl.BlockSpec((tile_r, LANES), lambda i: (i, 0)),  # x slab (streamed)
                smem_spec,  # w1 (H,)
                smem_spec,  # b1 (H,)
                smem_spec,  # w2 (H,)
                smem_spec,  # b2 (1,)
            ],
            out_specs=pl.BlockSpec((tile_r, LANES), lambda i: (i, 0)),
        ),
        compiler_params=pltpu.CompilerParams(
            dimension_semantics=("parallel",),
        ),
        cost_estimate=pl.CostEstimate(
            flops=4 * Np * H,
            transcendentals=0,
            bytes_accessed=8 * Np + 4 * (3 * H + 1),
        ),
    )(x_pad, w1, b1, w2, b2)

    # Strip the padded rows and restore the (N, 1) shape.
    return out2.reshape(Np)[:N].reshape(N, 1)


def init_params(hidden_neurons, key):
    # Shapes mirror nn.Linear:
    #   hidden: weight (H, 1), bias (H,);  output: weight (1, H), bias (1,)
    k1, k2, k3, k4 = jax.random.split(key, 4)
    bound = 1.0 / jnp.sqrt(jnp.float32(hidden_neurons))
    w_hidden = jax.random.uniform(k1, (hidden_neurons, 1), jnp.float32, -1.0, 1.0)
    b_hidden = jax.random.uniform(k2, (hidden_neurons,), jnp.float32, -1.0, 1.0)
    w_output = jax.random.uniform(k3, (1, hidden_neurons), jnp.float32, -bound, bound)
    b_output = jax.random.uniform(k4, (1,), jnp.float32, -bound, bound)
    # Kernel layout: flat (H,) vectors + (1,) bias.
    w1 = w_hidden.reshape(hidden_neurons)   # (H,)
    b1 = b_hidden                           # (H,)
    w2 = w_output.reshape(hidden_neurons)   # (H,)
    b2 = b_output                           # (1,)
    return w1, b1, w2, b2


def _reference(x, w1, b1, w2, b2):
    H = w1.shape[0]
    h = jnp.maximum(x @ w1.reshape(1, H) + b1.reshape(1, H), 0.0)
    return h @ w2.reshape(H, 1) + b2.reshape(1, 1)


if __name__ == "__main__":
    hidden_neurons = 32

    key = jax.random.PRNGKey(0)
    kx, kx2, kp = jax.random.split(key, 3)
    w1, b1, w2, b2 = init_params(hidden_neurons, kp)

    # Small batch (matches the module's (N, 1) input).
    batch = 8
    x = jax.random.normal(kx, (batch, 1), jnp.float32)
    out = jax.block_until_ready(net_forward(x, w1, b1, w2, b2))
    ref = _reference(x, w1, b1, w2, b2)
    assert out.shape == (batch, 1)
    assert jnp.allclose(out, ref, atol=1e-5), "mismatch vs reference (batch=8)"

    # Ragged batch (not a multiple of 128) to exercise the padding / strip path.
    batch2 = 300
    x2 = jax.random.normal(kx2, (batch2, 1), jnp.float32)
    out2 = jax.block_until_ready(net_forward(x2, w1, b1, w2, b2))
    ref2 = _reference(x2, w1, b1, w2, b2)
    assert out2.shape == (batch2, 1)
    assert jnp.allclose(out2, ref2, atol=1e-5), "mismatch vs reference (batch=300)"

    print("KERNEL_OK")
</pallas_src>

<mosaic_0001>
module attributes {stable_mosaic.version = 11 : i64} {
  func.func @mlp_kernel(%arg0: i32, %arg1: memref<8x128xf32, #tpu.memory_space<vmem>>, %arg2: memref<32xf32, #tpu.memory_space<smem>>, %arg3: memref<32xf32, #tpu.memory_space<smem>>, %arg4: memref<32xf32, #tpu.memory_space<smem>>, %arg5: memref<1xf32, #tpu.memory_space<smem>>, %arg6: memref<8x128xf32, #tpu.memory_space<vmem>>) attributes {dimension_semantics = [#tpu.dimension_semantics<parallel>], iteration_bounds = array<i64: 1>, scalar_prefetch = 0 : i64, scratch_operands = 0 : i64, tpu.core_type = #tpu.core_type<tc>, window_params = [{transform_indices = @transform_0, window_bounds = array<i64: 8, 128>}, {transform_indices = @transform_1, window_bounds = array<i64: 32>}, {transform_indices = @transform_2, window_bounds = array<i64: 32>}, {transform_indices = @transform_3, window_bounds = array<i64: 32>}, {transform_indices = @transform_4, window_bounds = array<i64: 1>}, {transform_indices = @transform_5, window_bounds = array<i64: 8, 128>}]} {
    %c0 = arith.constant 0 : index
    %c0_0 = arith.constant 0 : index
    %0 = vector.load %arg1[%c0, %c0_0] : memref<8x128xf32, #tpu.memory_space<vmem>>, vector<8x128xf32>
    %c0_1 = arith.constant 0 : index
    %1 = memref.load %arg5[%c0_1] : memref<1xf32, #tpu.memory_space<smem>>
    %2 = vector.broadcast %1 : f32 to vector<8x128xf32>
    %c0_2 = arith.constant 0 : index
    %3 = memref.load %arg2[%c0_2] : memref<32xf32, #tpu.memory_space<smem>>
    %4 = vector.broadcast %3 : f32 to vector<8x128xf32>
    %5 = arith.mulf %0, %4 : vector<8x128xf32>
    %c0_3 = arith.constant 0 : index
    %6 = memref.load %arg3[%c0_3] : memref<32xf32, #tpu.memory_space<smem>>
    %7 = vector.broadcast %6 : f32 to vector<8x128xf32>
    %8 = arith.addf %5, %7 : vector<8x128xf32>
    %cst = arith.constant 0.000000e+00 : f32
    %9 = vector.broadcast %cst : f32 to vector<8x128xf32>
    %10 = arith.maximumf %8, %9 : vector<8x128xf32>
    %c0_4 = arith.constant 0 : index
    %11 = memref.load %arg4[%c0_4] : memref<32xf32, #tpu.memory_space<smem>>
    %12 = vector.broadcast %11 : f32 to vector<8x128xf32>
    %13 = arith.mulf %10, %12 : vector<8x128xf32>
    %14 = arith.addf %2, %13 : vector<8x128xf32>
    %c1 = arith.constant 1 : index
    %15 = memref.load %arg2[%c1] : memref<32xf32, #tpu.memory_space<smem>>
    %16 = vector.broadcast %15 : f32 to vector<8x128xf32>
    %17 = arith.mulf %0, %16 : vector<8x128xf32>
    %c1_5 = arith.constant 1 : index
    %18 = memref.load %arg3[%c1_5] : memref<32xf32, #tpu.memory_space<smem>>
    %19 = vector.broadcast %18 : f32 to vector<8x128xf32>
    %20 = arith.addf %17, %19 : vector<8x128xf32>
    %cst_6 = arith.constant 0.000000e+00 : f32
    %21 = vector.broadcast %cst_6 : f32 to vector<8x128xf32>
    %22 = arith.maximumf %20, %21 : vector<8x128xf32>
    %c1_7 = arith.constant 1 : index
    %23 = memref.load %arg4[%c1_7] : memref<32xf32, #tpu.memory_space<smem>>
    %24 = vector.broadcast %23 : f32 to vector<8x128xf32>
    %25 = arith.mulf %22, %24 : vector<8x128xf32>
    %26 = arith.addf %14, %25 : vector<8x128xf32>
    %c2 = arith.constant 2 : index
    %27 = memref.load %arg2[%c2] : memref<32xf32, #tpu.memory_space<smem>>
    %28 = vector.broadcast %27 : f32 to vector<8x128xf32>
    %29 = arith.mulf %0, %28 : vector<8x128xf32>
    %c2_8 = arith.constant 2 : index
    %30 = memref.load %arg3[%c2_8] : memref<32xf32, #tpu.memory_space<smem>>
    %31 = vector.broadcast %30 : f32 to vector<8x128xf32>
    %32 = arith.addf %29, %31 : vector<8x128xf32>
    %cst_9 = arith.constant 0.000000e+00 : f32
    %33 = vector.broadcast %cst_9 : f32 to vector<8x128xf32>
    %34 = arith.maximumf %32, %33 : vector<8x128xf32>
    %c2_10 = arith.constant 2 : index
    %35 = memref.load %arg4[%c2_10] : memref<32xf32, #tpu.memory_space<smem>>
    %36 = vector.broadcast %35 : f32 to vector<8x128xf32>
    %37 = arith.mulf %34, %36 : vector<8x128xf32>
    %38 = arith.addf %26, %37 : vector<8x128xf32>
    %c3 = arith.constant 3 : index
    %39 = memref.load %arg2[%c3] : memref<32xf32, #tpu.memory_space<smem>>
    %40 = vector.broadcast %39 : f32 to vector<8x128xf32>
    %41 = arith.mulf %0, %40 : vector<8x128xf32>
    %c3_11 = arith.constant 3 : index
    %42 = memref.load %arg3[%c3_11] : memref<32xf32, #tpu.memory_space<smem>>
    %43 = vector.broadcast %42 : f32 to vector<8x128xf32>
    %44 = arith.addf %41, %43 : vector<8x128xf32>
    %cst_12 = arith.constant 0.000000e+00 : f32
    %45 = vector.broadcast %cst_12 : f32 to vector<8x128xf32>
    %46 = arith.maximumf %44, %45 : vector<8x128xf32>
    %c3_13 = arith.constant 3 : index
    %47 = memref.load %arg4[%c3_13] : memref<32xf32, #tpu.memory_space<smem>>
    %48 = vector.broadcast %47 : f32 to vector<8x128xf32>
    %49 = arith.mulf %46, %48 : vector<8x128xf32>
    %50 = arith.addf %38, %49 : vector<8x128xf32>
    %c4 = arith.constant 4 : index
    %51 = memref.load %arg2[%c4] : memref<32xf32, #tpu.memory_space<smem>>
    %52 = vector.broadcast %51 : f32 to vector<8x128xf32>
    %53 = arith.mulf %0, %52 : vector<8x128xf32>
    %c4_14 = arith.constant 4 : index
    %54 = memref.load %arg3[%c4_14] : memref<32xf32, #tpu.memory_space<smem>>
    %55 = vector.broadcast %54 : f32 to vector<8x128xf32>
    %56 = arith.addf %53, %55 : vector<8x128xf32>
    %cst_15 = arith.constant 0.000000e+00 : f32
    %57 = vector.broadcast %cst_15 : f32 to vector<8x128xf32>
    %58 = arith.maximumf %56, %57 : vector<8x128xf32>
    %c4_16 = arith.constant 4 : index
    %59 = memref.load %arg4[%c4_16] : memref<32xf32, #tpu.memory_space<smem>>
    %60 = vector.broadcast %59 : f32 to vector<8x128xf32>
    %61 = arith.mulf %58, %60 : vector<8x128xf32>
    %62 = arith.addf %50, %61 : vector<8x128xf32>
    %c5 = arith.constant 5 : index
    %63 = memref.load %arg2[%c5] : memref<32xf32, #tpu.memory_space<smem>>
    %64 = vector.broadcast %63 : f32 to vector<8x128xf32>
    %65 = arith.mulf %0, %64 : vector<8x128xf32>
    %c5_17 = arith.constant 5 : index
    %66 = memref.load %arg3[%c5_17] : memref<32xf32, #tpu.memory_space<smem>>
    %67 = vector.broadcast %66 : f32 to vector<8x128xf32>
    %68 = arith.addf %65, %67 : vector<8x128xf32>
    %cst_18 = arith.constant 0.000000e+00 : f32
    %69 = vector.broadcast %cst_18 : f32 to vector<8x128xf32>
    %70 = arith.maximumf %68, %69 : vector<8x128xf32>
    %c5_19 = arith.constant 5 : index
    %71 = memref.load %arg4[%c5_19] : memref<32xf32, #tpu.memory_space<smem>>
    %72 = vector.broadcast %71 : f32 to vector<8x128xf32>
    %73 = arith.mulf %70, %72 : vector<8x128xf32>
    %74 = arith.addf %62, %73 : vector<8x128xf32>
    %c6 = arith.constant 6 : index
    %75 = memref.load %arg2[%c6] : memref<32xf32, #tpu.memory_space<smem>>
    %76 = vector.broadcast %75 : f32 to vector<8x128xf32>
    %77 = arith.mulf %0, %76 : vector<8x128xf32>
    %c6_20 = arith.constant 6 : index
    %78 = memref.load %arg3[%c6_20] : memref<32xf32, #tpu.memory_space<smem>>
    %79 = vector.broadcast %78 : f32 to vector<8x128xf32>
    %80 = arith.addf %77, %79 : vector<8x128xf32>
    %cst_21 = arith.constant 0.000000e+00 : f32
    %81 = vector.broadcast %cst_21 : f32 to vector<8x128xf32>
    %82 = arith.maximumf %80, %81 : vector<8x128xf32>
    %c6_22 = arith.constant 6 : index
    %83 = memref.load %arg4[%c6_22] : memref<32xf32, #tpu.memory_space<smem>>
    %84 = vector.broadcast %83 : f32 to vector<8x128xf32>
    %85 = arith.mulf %82, %84 : vector<8x128xf32>
    %86 = arith.addf %74, %85 : vector<8x128xf32>
    %c7 = arith.constant 7 : index
    %87 = memref.load %arg2[%c7] : memref<32xf32, #tpu.memory_space<smem>>
    %88 = vector.broadcast %87 : f32 to vector<8x128xf32>
    %89 = arith.mulf %0, %88 : vector<8x128xf32>
    %c7_23 = arith.constant 7 : index
    %90 = memref.load %arg3[%c7_23] : memref<32xf32, #tpu.memory_space<smem>>
    %91 = vector.broadcast %90 : f32 to vector<8x128xf32>
    %92 = arith.addf %89, %91 : vector<8x128xf32>
    %cst_24 = arith.constant 0.000000e+00 : f32
    %93 = vector.broadcast %cst_24 : f32 to vector<8x128xf32>
    %94 = arith.maximumf %92, %93 : vector<8x128xf32>
    %c7_25 = arith.constant 7 : index
    %95 = memref.load %arg4[%c7_25] : memref<32xf32, #tpu.memory_space<smem>>
    %96 = vector.broadcast %95 : f32 to vector<8x128xf32>
    %97 = arith.mulf %94, %96 : vector<8x128xf32>
    %98 = arith.addf %86, %97 : vector<8x128xf32>
    %c8 = arith.constant 8 : index
    %99 = memref.load %arg2[%c8] : memref<32xf32, #tpu.memory_space<smem>>
    %100 = vector.broadcast %99 : f32 to vector<8x128xf32>
    %101 = arith.mulf %0, %100 : vector<8x128xf32>
    %c8_26 = arith.constant 8 : index
    %102 = memref.load %arg3[%c8_26] : memref<32xf32, #tpu.memory_space<smem>>
    %103 = vector.broadcast %102 : f32 to vector<8x128xf32>
    %104 = arith.addf %101, %103 : vector<8x128xf32>
    %cst_27 = arith.constant 0.000000e+00 : f32
    %105 = vector.broadcast %cst_27 : f32 to vector<8x128xf32>
    %106 = arith.maximumf %104, %105 : vector<8x128xf32>
    %c8_28 = arith.constant 8 : index
    %107 = memref.load %arg4[%c8_28] : memref<32xf32, #tpu.memory_space<smem>>
    %108 = vector.broadcast %107 : f32 to vector<8x128xf32>
    %109 = arith.mulf %106, %108 : vector<8x128xf32>
    %110 = arith.addf %98, %109 : vector<8x128xf32>
    %c9 = arith.constant 9 : index
    %111 = memref.load %arg2[%c9] : memref<32xf32, #tpu.memory_space<smem>>
    %112 = vector.broadcast %111 : f32 to vector<8x128xf32>
    %113 = arith.mulf %0, %112 : vector<8x128xf32>
    %c9_29 = arith.constant 9 : index
    %114 = memref.load %arg3[%c9_29] : memref<32xf32, #tpu.memory_space<smem>>
    %115 = vector.broadcast %114 : f32 to vector<8x128xf32>
    %116 = arith.addf %113, %115 : vector<8x128xf32>
    %cst_30 = arith.constant 0.000000e+00 : f32
    %117 = vector.broadcast %cst_30 : f32 to vector<8x128xf32>
    %118 = arith.maximumf %116, %117 : vector<8x128xf32>
    %c9_31 = arith.constant 9 : index
    %119 = memref.load %arg4[%c9_31] : memref<32xf32, #tpu.memory_space<smem>>
    %120 = vector.broadcast %119 : f32 to vector<8x128xf32>
    %121 = arith.mulf %118, %120 : vector<8x128xf32>
    %122 = arith.addf %110, %121 : vector<8x128xf32>
    %c10 = arith.constant 10 : index
    %123 = memref.load %arg2[%c10] : memref<32xf32, #tpu.memory_space<smem>>
    %124 = vector.broadcast %123 : f32 to vector<8x128xf32>
    %125 = arith.mulf %0, %124 : vector<8x128xf32>
    %c10_32 = arith.constant 10 : index
    %126 = memref.load %arg3[%c10_32] : memref<32xf32, #tpu.memory_space<smem>>
    %127 = vector.broadcast %126 : f32 to vector<8x128xf32>
    %128 = arith.addf %125, %127 : vector<8x128xf32>
    %cst_33 = arith.constant 0.000000e+00 : f32
    %129 = vector.broadcast %cst_33 : f32 to vector<8x128xf32>
    %130 = arith.maximumf %128, %129 : vector<8x128xf32>
    %c10_34 = arith.constant 10 : index
    %131 = memref.load %arg4[%c10_34] : memref<32xf32, #tpu.memory_space<smem>>
    %132 = vector.broadcast %131 : f32 to vector<8x128xf32>
    %133 = arith.mulf %130, %132 : vector<8x128xf32>
    %134 = arith.addf %122, %133 : vector<8x128xf32>
    %c11 = arith.constant 11 : index
    %135 = memref.load %arg2[%c11] : memref<32xf32, #tpu.memory_space<smem>>
    %136 = vector.broadcast %135 : f32 to vector<8x128xf32>
    %137 = arith.mulf %0, %136 : vector<8x128xf32>
    %c11_35 = arith.constant 11 : index
    %138 = memref.load %arg3[%c11_35] : memref<32xf32, #tpu.memory_space<smem>>
    %139 = vector.broadcast %138 : f32 to vector<8x128xf32>
    %140 = arith.addf %137, %139 : vector<8x128xf32>
    %cst_36 = arith.constant 0.000000e+00 : f32
    %141 = vector.broadcast %cst_36 : f32 to vector<8x128xf32>
    %142 = arith.maximumf %140, %141 : vector<8x128xf32>
    %c11_37 = arith.constant 11 : index
    %143 = memref.load %arg4[%c11_37] : memref<32xf32, #tpu.memory_space<smem>>
    %144 = vector.broadcast %143 : f32 to vector<8x128xf32>
    %145 = arith.mulf %142, %144 : vector<8x128xf32>
    %146 = arith.addf %134, %145 : vector<8x128xf32>
    %c12 = arith.constant 12 : index
    %147 = memref.load %arg2[%c12] : memref<32xf32, #tpu.memory_space<smem>>
    %148 = vector.broadcast %147 : f32 to vector<8x128xf32>
    %149 = arith.mulf %0, %148 : vector<8x128xf32>
    %c12_38 = arith.constant 12 : index
    %150 = memref.load %arg3[%c12_38] : memref<32xf32, #tpu.memory_space<smem>>
    %151 = vector.broadcast %150 : f32 to vector<8x128xf32>
    %152 = arith.addf %149, %151 : vector<8x128xf32>
    %cst_39 = arith.constant 0.000000e+00 : f32
    %153 = vector.broadcast %cst_39 : f32 to vector<8x128xf32>
    %154 = arith.maximumf %152, %153 : vector<8x128xf32>
    %c12_40 = arith.constant 12 : index
    %155 = memref.load %arg4[%c12_40] : memref<32xf32, #tpu.memory_space<smem>>
    %156 = vector.broadcast %155 : f32 to vector<8x128xf32>
    %157 = arith.mulf %154, %156 : vector<8x128xf32>
    %158 = arith.addf %146, %157 : vector<8x128xf32>
    %c13 = arith.constant 13 : index
    %159 = memref.load %arg2[%c13] : memref<32xf32, #tpu.memory_space<smem>>
    %160 = vector.broadcast %159 : f32 to vector<8x128xf32>
    %161 = arith.mulf %0, %160 : vector<8x128xf32>
    %c13_41 = arith.constant 13 : index
    %162 = memref.load %arg3[%c13_41] : memref<32xf32, #tpu.memory_space<smem>>
    %163 = vector.broadcast %162 : f32 to vector<8x128xf32>
    %164 = arith.addf %161, %163 : vector<8x128xf32>
    %cst_42 = arith.constant 0.000000e+00 : f32
    %165 = vector.broadcast %cst_42 : f32 to vector<8x128xf32>
    %166 = arith.maximumf %164, %165 : vector<8x128xf32>
    %c13_43 = arith.constant 13 : index
    %167 = memref.load %arg4[%c13_43] : memref<32xf32, #tpu.memory_space<smem>>
    %168 = vector.broadcast %167 : f32 to vector<8x128xf32>
    %169 = arith.mulf %166, %168 : vector<8x128xf32>
    %170 = arith.addf %158, %169 : vector<8x128xf32>
    %c14 = arith.constant 14 : index
    %171 = memref.load %arg2[%c14] : memref<32xf32, #tpu.memory_space<smem>>
    %172 = vector.broadcast %171 : f32 to vector<8x128xf32>
    %173 = arith.mulf %0, %172 : vector<8x128xf32>
    %c14_44 = arith.constant 14 : index
    %174 = memref.load %arg3[%c14_44] : memref<32xf32, #tpu.memory_space<smem>>
    %175 = vector.broadcast %174 : f32 to vector<8x128xf32>
    %176 = arith.addf %173, %175 : vector<8x128xf32>
    %cst_45 = arith.constant 0.000000e+00 : f32
    %177 = vector.broadcast %cst_45 : f32 to vector<8x128xf32>
    %178 = arith.maximumf %176, %177 : vector<8x128xf32>
    %c14_46 = arith.constant 14 : index
    %179 = memref.load %arg4[%c14_46] : memref<32xf32, #tpu.memory_space<smem>>
    %180 = vector.broadcast %179 : f32 to vector<8x128xf32>
    %181 = arith.mulf %178, %180 : vector<8x128xf32>
    %182 = arith.addf %170, %181 : vector<8x128xf32>
    %c15 = arith.constant 15 : index
    %183 = memref.load %arg2[%c15] : memref<32xf32, #tpu.memory_space<smem>>
    %184 = vector.broadcast %183 : f32 to vector<8x128xf32>
    %185 = arith.mulf %0, %184 : vector<8x128xf32>
    %c15_47 = arith.constant 15 : index
    %186 = memref.load %arg3[%c15_47] : memref<32xf32, #tpu.memory_space<smem>>
    %187 = vector.broadcast %186 : f32 to vector<8x128xf32>
    %188 = arith.addf %185, %187 : vector<8x128xf32>
    %cst_48 = arith.constant 0.000000e+00 : f32
    %189 = vector.broadcast %cst_48 : f32 to vector<8x128xf32>
    %190 = arith.maximumf %188, %189 : vector<8x128xf32>
    %c15_49 = arith.constant 15 : index
    %191 = memref.load %arg4[%c15_49] : memref<32xf32, #tpu.memory_space<smem>>
    %192 = vector.broadcast %191 : f32 to vector<8x128xf32>
    %193 = arith.mulf %190, %192 : vector<8x128xf32>
    %194 = arith.addf %182, %193 : vector<8x128xf32>
    %c16 = arith.constant 16 : index
    %195 = memref.load %arg2[%c16] : memref<32xf32, #tpu.memory_space<smem>>
    %196 = vector.broadcast %195 : f32 to vector<8x128xf32>
    %197 = arith.mulf %0, %196 : vector<8x128xf32>
    %c16_50 = arith.constant 16 : index
    %198 = memref.load %arg3[%c16_50] : memref<32xf32, #tpu.memory_space<smem>>
    %199 = vector.broadcast %198 : f32 to vector<8x128xf32>
    %200 = arith.addf %197, %199 : vector<8x128xf32>
    %cst_51 = arith.constant 0.000000e+00 : f32
    %201 = vector.broadcast %cst_51 : f32 to vector<8x128xf32>
    %202 = arith.maximumf %200, %201 : vector<8x128xf32>
    %c16_52 = arith.constant 16 : index
    %203 = memref.load %arg4[%c16_52] : memref<32xf32, #tpu.memory_space<smem>>
    %204 = vector.broadcast %203 : f32 to vector<8x128xf32>
    %205 = arith.mulf %202, %204 : vector<8x128xf32>
    %206 = arith.addf %194, %205 : vector<8x128xf32>
    %c17 = arith.constant 17 : index
    %207 = memref.load %arg2[%c17] : memref<32xf32, #tpu.memory_space<smem>>
    %208 = vector.broadcast %207 : f32 to vector<8x128xf32>
    %209 = arith.mulf %0, %208 : vector<8x128xf32>
    %c17_53 = arith.constant 17 : index
    %210 = memref.load %arg3[%c17_53] : memref<32xf32, #tpu.memory_space<smem>>
    %211 = vector.broadcast %210 : f32 to vector<8x128xf32>
    %212 = arith.addf %209, %211 : vector<8x128xf32>
    %cst_54 = arith.constant 0.000000e+00 : f32
    %213 = vector.broadcast %cst_54 : f32 to vector<8x128xf32>
    %214 = arith.maximumf %212, %213 : vector<8x128xf32>
    %c17_55 = arith.constant 17 : index
    %215 = memref.load %arg4[%c17_55] : memref<32xf32, #tpu.memory_space<smem>>
    %216 = vector.broadcast %215 : f32 to vector<8x128xf32>
    %217 = arith.mulf %214, %216 : vector<8x128xf32>
    %218 = arith.addf %206, %217 : vector<8x128xf32>
    %c18 = arith.constant 18 : index
    %219 = memref.load %arg2[%c18] : memref<32xf32, #tpu.memory_space<smem>>
    %220 = vector.broadcast %219 : f32 to vector<8x128xf32>
    %221 = arith.mulf %0, %220 : vector<8x128xf32>
    %c18_56 = arith.constant 18 : index
    %222 = memref.load %arg3[%c18_56] : memref<32xf32, #tpu.memory_space<smem>>
    %223 = vector.broadcast %222 : f32 to vector<8x128xf32>
    %224 = arith.addf %221, %223 : vector<8x128xf32>
    %cst_57 = arith.constant 0.000000e+00 : f32
    %225 = vector.broadcast %cst_57 : f32 to vector<8x128xf32>
    %226 = arith.maximumf %224, %225 : vector<8x128xf32>
    %c18_58 = arith.constant 18 : index
    %227 = memref.load %arg4[%c18_58] : memref<32xf32, #tpu.memory_space<smem>>
    %228 = vector.broadcast %227 : f32 to vector<8x128xf32>
    %229 = arith.mulf %226, %228 : vector<8x128xf32>
    %230 = arith.addf %218, %229 : vector<8x128xf32>
    %c19 = arith.constant 19 : index
    %231 = memref.load %arg2[%c19] : memref<32xf32, #tpu.memory_space<smem>>
    %232 = vector.broadcast %231 : f32 to vector<8x128xf32>
    %233 = arith.mulf %0, %232 : vector<8x128xf32>
    %c19_59 = arith.constant 19 : index
    %234 = memref.load %arg3[%c19_59] : memref<32xf32, #tpu.memory_space<smem>>
    %235 = vector.broadcast %234 : f32 to vector<8x128xf32>
    %236 = arith.addf %233, %235 : vector<8x128xf32>
    %cst_60 = arith.constant 0.000000e+00 : f32
    %237 = vector.broadcast %cst_60 : f32 to vector<8x128xf32>
    %238 = arith.maximumf %236, %237 : vector<8x128xf32>
    %c19_61 = arith.constant 19 : index
    %239 = memref.load %arg4[%c19_61] : memref<32xf32, #tpu.memory_space<smem>>
    %240 = vector.broadcast %239 : f32 to vector<8x128xf32>
    %241 = arith.mulf %238, %240 : vector<8x128xf32>
    %242 = arith.addf %230, %241 : vector<8x128xf32>
    %c20 = arith.constant 20 : index
    %243 = memref.load %arg2[%c20] : memref<32xf32, #tpu.memory_space<smem>>
    %244 = vector.broadcast %243 : f32 to vector<8x128xf32>
    %245 = arith.mulf %0, %244 : vector<8x128xf32>
    %c20_62 = arith.constant 20 : index
    %246 = memref.load %arg3[%c20_62] : memref<32xf32, #tpu.memory_space<smem>>
    %247 = vector.broadcast %246 : f32 to vector<8x128xf32>
    %248 = arith.addf %245, %247 : vector<8x128xf32>
    %cst_63 = arith.constant 0.000000e+00 : f32
    %249 = vector.broadcast %cst_63 : f32 to vector<8x128xf32>
    %250 = arith.maximumf %248, %249 : vector<8x128xf32>
    %c20_64 = arith.constant 20 : index
    %251 = memref.load %arg4[%c20_64] : memref<32xf32, #tpu.memory_space<smem>>
    %252 = vector.broadcast %251 : f32 to vector<8x128xf32>
    %253 = arith.mulf %250, %252 : vector<8x128xf32>
    %254 = arith.addf %242, %253 : vector<8x128xf32>
    %c21 = arith.constant 21 : index
    %255 = memref.load %arg2[%c21] : memref<32xf32, #tpu.memory_space<smem>>
    %256 = vector.broadcast %255 : f32 to vector<8x128xf32>
    %257 = arith.mulf %0, %256 : vector<8x128xf32>
    %c21_65 = arith.constant 21 : index
    %258 = memref.load %arg3[%c21_65] : memref<32xf32, #tpu.memory_space<smem>>
    %259 = vector.broadcast %258 : f32 to vector<8x128xf32>
    %260 = arith.addf %257, %259 : vector<8x128xf32>
    %cst_66 = arith.constant 0.000000e+00 : f32
    %261 = vector.broadcast %cst_66 : f32 to vector<8x128xf32>
    %262 = arith.maximumf %260, %261 : vector<8x128xf32>
    %c21_67 = arith.constant 21 : index
    %263 = memref.load %arg4[%c21_67] : memref<32xf32, #tpu.memory_space<smem>>
    %264 = vector.broadcast %263 : f32 to vector<8x128xf32>
    %265 = arith.mulf %262, %264 : vector<8x128xf32>
    %266 = arith.addf %254, %265 : vector<8x128xf32>
    %c22 = arith.constant 22 : index
    %267 = memref.load %arg2[%c22] : memref<32xf32, #tpu.memory_space<smem>>
    %268 = vector.broadcast %267 : f32 to vector<8x128xf32>
    %269 = arith.mulf %0, %268 : vector<8x128xf32>
    %c22_68 = arith.constant 22 : index
    %270 = memref.load %arg3[%c22_68] : memref<32xf32, #tpu.memory_space<smem>>
    %271 = vector.broadcast %270 : f32 to vector<8x128xf32>
    %272 = arith.addf %269, %271 : vector<8x128xf32>
    %cst_69 = arith.constant 0.000000e+00 : f32
    %273 = vector.broadcast %cst_69 : f32 to vector<8x128xf32>
    %274 = arith.maximumf %272, %273 : vector<8x128xf32>
    %c22_70 = arith.constant 22 : index
    %275 = memref.load %arg4[%c22_70] : memref<32xf32, #tpu.memory_space<smem>>
    %276 = vector.broadcast %275 : f32 to vector<8x128xf32>
    %277 = arith.mulf %274, %276 : vector<8x128xf32>
    %278 = arith.addf %266, %277 : vector<8x128xf32>
    %c23 = arith.constant 23 : index
    %279 = memref.load %arg2[%c23] : memref<32xf32, #tpu.memory_space<smem>>
    %280 = vector.broadcast %279 : f32 to vector<8x128xf32>
    %281 = arith.mulf %0, %280 : vector<8x128xf32>
    %c23_71 = arith.constant 23 : index
    %282 = memref.load %arg3[%c23_71] : memref<32xf32, #tpu.memory_space<smem>>
    %283 = vector.broadcast %282 : f32 to vector<8x128xf32>
    %284 = arith.addf %281, %283 : vector<8x128xf32>
    %cst_72 = arith.constant 0.000000e+00 : f32
    %285 = vector.broadcast %cst_72 : f32 to vector<8x128xf32>
    %286 = arith.maximumf %284, %285 : vector<8x128xf32>
    %c23_73 = arith.constant 23 : index
    %287 = memref.load %arg4[%c23_73] : memref<32xf32, #tpu.memory_space<smem>>
    %288 = vector.broadcast %287 : f32 to vector<8x128xf32>
    %289 = arith.mulf %286, %288 : vector<8x128xf32>
    %290 = arith.addf %278, %289 : vector<8x128xf32>
    %c24 = arith.constant 24 : index
    %291 = memref.load %arg2[%c24] : memref<32xf32, #tpu.memory_space<smem>>
    %292 = vector.broadcast %291 : f32 to vector<8x128xf32>
    %293 = arith.mulf %0, %292 : vector<8x128xf32>
    %c24_74 = arith.constant 24 : index
    %294 = memref.load %arg3[%c24_74] : memref<32xf32, #tpu.memory_space<smem>>
    %295 = vector.broadcast %294 : f32 to vector<8x128xf32>
    %296 = arith.addf %293, %295 : vector<8x128xf32>
    %cst_75 = arith.constant 0.000000e+00 : f32
    %297 = vector.broadcast %cst_75 : f32 to vector<8x128xf32>
    %298 = arith.maximumf %296, %297 : vector<8x128xf32>
    %c24_76 = arith.constant 24 : index
    %299 = memref.load %arg4[%c24_76] : memref<32xf32, #tpu.memory_space<smem>>
    %300 = vector.broadcast %299 : f32 to vector<8x128xf32>
    %301 = arith.mulf %298, %300 : vector<8x128xf32>
    %302 = arith.addf %290, %301 : vector<8x128xf32>
    %c25 = arith.constant 25 : index
    %303 = memref.load %arg2[%c25] : memref<32xf32, #tpu.memory_space<smem>>
    %304 = vector.broadcast %303 : f32 to vector<8x128xf32>
    %305 = arith.mulf %0, %304 : vector<8x128xf32>
    %c25_77 = arith.constant 25 : index
    %306 = memref.load %arg3[%c25_77] : memref<32xf32, #tpu.memory_space<smem>>
    %307 = vector.broadcast %306 : f32 to vector<8x128xf32>
    %308 = arith.addf %305, %307 : vector<8x128xf32>
    %cst_78 = arith.constant 0.000000e+00 : f32
    %309 = vector.broadcast %cst_78 : f32 to vector<8x128xf32>
    %310 = arith.maximumf %308, %309 : vector<8x128xf32>
    %c25_79 = arith.constant 25 : index
    %311 = memref.load %arg4[%c25_79] : memref<32xf32, #tpu.memory_space<smem>>
    %312 = vector.broadcast %311 : f32 to vector<8x128xf32>
    %313 = arith.mulf %310, %312 : vector<8x128xf32>
    %314 = arith.addf %302, %313 : vector<8x128xf32>
    %c26 = arith.constant 26 : index
    %315 = memref.load %arg2[%c26] : memref<32xf32, #tpu.memory_space<smem>>
    %316 = vector.broadcast %315 : f32 to vector<8x128xf32>
    %317 = arith.mulf %0, %316 : vector<8x128xf32>
    %c26_80 = arith.constant 26 : index
    %318 = memref.load %arg3[%c26_80] : memref<32xf32, #tpu.memory_space<smem>>
    %319 = vector.broadcast %318 : f32 to vector<8x128xf32>
    %320 = arith.addf %317, %319 : vector<8x128xf32>
    %cst_81 = arith.constant 0.000000e+00 : f32
    %321 = vector.broadcast %cst_81 : f32 to vector<8x128xf32>
    %322 = arith.maximumf %320, %321 : vector<8x128xf32>
    %c26_82 = arith.constant 26 : index
    %323 = memref.load %arg4[%c26_82] : memref<32xf32, #tpu.memory_space<smem>>
    %324 = vector.broadcast %323 : f32 to vector<8x128xf32>
    %325 = arith.mulf %322, %324 : vector<8x128xf32>
    %326 = arith.addf %314, %325 : vector<8x128xf32>
    %c27 = arith.constant 27 : index
    %327 = memref.load %arg2[%c27] : memref<32xf32, #tpu.memory_space<smem>>
    %328 = vector.broadcast %327 : f32 to vector<8x128xf32>
    %329 = arith.mulf %0, %328 : vector<8x128xf32>
    %c27_83 = arith.constant 27 : index
    %330 = memref.load %arg3[%c27_83] : memref<32xf32, #tpu.memory_space<smem>>
    %331 = vector.broadcast %330 : f32 to vector<8x128xf32>
    %332 = arith.addf %329, %331 : vector<8x128xf32>
    %cst_84 = arith.constant 0.000000e+00 : f32
    %333 = vector.broadcast %cst_84 : f32 to vector<8x128xf32>
    %334 = arith.maximumf %332, %333 : vector<8x128xf32>
    %c27_85 = arith.constant 27 : index
    %335 = memref.load %arg4[%c27_85] : memref<32xf32, #tpu.memory_space<smem>>
    %336 = vector.broadcast %335 : f32 to vector<8x128xf32>
    %337 = arith.mulf %334, %336 : vector<8x128xf32>
    %338 = arith.addf %326, %337 : vector<8x128xf32>
    %c28 = arith.constant 28 : index
    %339 = memref.load %arg2[%c28] : memref<32xf32, #tpu.memory_space<smem>>
    %340 = vector.broadcast %339 : f32 to vector<8x128xf32>
    %341 = arith.mulf %0, %340 : vector<8x128xf32>
    %c28_86 = arith.constant 28 : index
    %342 = memref.load %arg3[%c28_86] : memref<32xf32, #tpu.memory_space<smem>>
    %343 = vector.broadcast %342 : f32 to vector<8x128xf32>
    %344 = arith.addf %341, %343 : vector<8x128xf32>
    %cst_87 = arith.constant 0.000000e+00 : f32
    %345 = vector.broadcast %cst_87 : f32 to vector<8x128xf32>
    %346 = arith.maximumf %344, %345 : vector<8x128xf32>
    %c28_88 = arith.constant 28 : index
    %347 = memref.load %arg4[%c28_88] : memref<32xf32, #tpu.memory_space<smem>>
    %348 = vector.broadcast %347 : f32 to vector<8x128xf32>
    %349 = arith.mulf %346, %348 : vector<8x128xf32>
    %350 = arith.addf %338, %349 : vector<8x128xf32>
    %c29 = arith.constant 29 : index
    %351 = memref.load %arg2[%c29] : memref<32xf32, #tpu.memory_space<smem>>
    %352 = vector.broadcast %351 : f32 to vector<8x128xf32>
    %353 = arith.mulf %0, %352 : vector<8x128xf32>
    %c29_89 = arith.constant 29 : index
    %354 = memref.load %arg3[%c29_89] : memref<32xf32, #tpu.memory_space<smem>>
    %355 = vector.broadcast %354 : f32 to vector<8x128xf32>
    %356 = arith.addf %353, %355 : vector<8x128xf32>
    %cst_90 = arith.constant 0.000000e+00 : f32
    %357 = vector.broadcast %cst_90 : f32 to vector<8x128xf32>
    %358 = arith.maximumf %356, %357 : vector<8x128xf32>
    %c29_91 = arith.constant 29 : index
    %359 = memref.load %arg4[%c29_91] : memref<32xf32, #tpu.memory_space<smem>>
    %360 = vector.broadcast %359 : f32 to vector<8x128xf32>
    %361 = arith.mulf %358, %360 : vector<8x128xf32>
    %362 = arith.addf %350, %361 : vector<8x128xf32>
    %c30 = arith.constant 30 : index
    %363 = memref.load %arg2[%c30] : memref<32xf32, #tpu.memory_space<smem>>
    %364 = vector.broadcast %363 : f32 to vector<8x128xf32>
    %365 = arith.mulf %0, %364 : vector<8x128xf32>
    %c30_92 = arith.constant 30 : index
    %366 = memref.load %arg3[%c30_92] : memref<32xf32, #tpu.memory_space<smem>>
    %367 = vector.broadcast %366 : f32 to vector<8x128xf32>
    %368 = arith.addf %365, %367 : vector<8x128xf32>
    %cst_93 = arith.constant 0.000000e+00 : f32
    %369 = vector.broadcast %cst_93 : f32 to vector<8x128xf32>
    %370 = arith.maximumf %368, %369 : vector<8x128xf32>
    %c30_94 = arith.constant 30 : index
    %371 = memref.load %arg4[%c30_94] : memref<32xf32, #tpu.memory_space<smem>>
    %372 = vector.broadcast %371 : f32 to vector<8x128xf32>
    %373 = arith.mulf %370, %372 : vector<8x128xf32>
    %374 = arith.addf %362, %373 : vector<8x128xf32>
    %c31 = arith.constant 31 : index
    %375 = memref.load %arg2[%c31] : memref<32xf32, #tpu.memory_space<smem>>
    %376 = vector.broadcast %375 : f32 to vector<8x128xf32>
    %377 = arith.mulf %0, %376 : vector<8x128xf32>
    %c31_95 = arith.constant 31 : index
    %378 = memref.load %arg3[%c31_95] : memref<32xf32, #tpu.memory_space<smem>>
    %379 = vector.broadcast %378 : f32 to vector<8x128xf32>
    %380 = arith.addf %377, %379 : vector<8x128xf32>
    %cst_96 = arith.constant 0.000000e+00 : f32
    %381 = vector.broadcast %cst_96 : f32 to vector<8x128xf32>
    %382 = arith.maximumf %380, %381 : vector<8x128xf32>
    %c31_97 = arith.constant 31 : index
    %383 = memref.load %arg4[%c31_97] : memref<32xf32, #tpu.memory_space<smem>>
    %384 = vector.broadcast %383 : f32 to vector<8x128xf32>
    %385 = arith.mulf %382, %384 : vector<8x128xf32>
    %386 = arith.addf %374, %385 : vector<8x128xf32>
    %c0_98 = arith.constant 0 : index
    %c0_99 = arith.constant 0 : index
    %387 = vector.load %arg6[%c0_98, %c0_99] : memref<8x128xf32, #tpu.memory_space<vmem>>, vector<8x128xf32>
    tpu.vector_store %arg6[%c0_98, %c0_99], %386 {strides = array<i32>} : memref<8x128xf32, #tpu.memory_space<vmem>>, vector<8x128xf32>,
    return
  }
  func.func @transform_0(%arg0: i32) -> (i32, i32) {
    %c0_i32 = arith.constant 0 : i32
    %c0_i32_0 = arith.constant 0 : i32
    return %arg0, %c0_i32 : i32, i32
  }
  func.func @transform_1(%arg0: i32) -> i32 {
    %c0_i32 = arith.constant 0 : i32
    %c0_i32_0 = arith.constant 0 : i32
    return %c0_i32 : i32
  }
  func.func @transform_2(%arg0: i32) -> i32 {
    %c0_i32 = arith.constant 0 : i32
    %c0_i32_0 = arith.constant 0 : i32
    return %c0_i32 : i32
  }
  func.func @transform_3(%arg0: i32) -> i32 {
    %c0_i32 = arith.constant 0 : i32
    %c0_i32_0 = arith.constant 0 : i32
    return %c0_i32 : i32
  }
  func.func @transform_4(%arg0: i32) -> i32 {
    %c0_i32 = arith.constant 0 : i32
    %c0_i32_0 = arith.constant 0 : i32
    return %c0_i32 : i32
  }
  func.func @transform_5(%arg0: i32) -> (i32, i32) {
    %c0_i32 = arith.constant 0 : i32
    %c0_i32_0 = arith.constant 0 : i32
    return %arg0, %c0_i32 : i32, i32
  }
}

</mosaic_0001>

<llo_original>
// kernel: tpu_custom_call.1
$region0: #{tpu_custom_call.1}
  #allocation0 [shape = 'u32[]', space=smem, size = 0x4, offset = 0x4, fixed_abs, tag = 'smem constant byte address 0x4 - core index']
  #allocation1 [shape = 'u32[144,128]{1,0:T(1,128)}', space=vmem, size = 0x12000, scoped, tag = 'internal scratch']
  #allocation2 [shape = 'f32[1]{0:T(128)S(6)}', space=smem, size = 0x200, scoped, tag = 'scoped memory for tpu_custom_call.1']
  %s0 = inlined_call_operand.hbm [shape: f32[8,128], index: 0, kind: input, shape index: {}]
  %s1 = inlined_call_operand.vmem [shape: f32[32], index: 1, kind: input, shape index: {}]
  %s2 = inlined_call_operand.vmem [shape: f32[32], index: 2, kind: input, shape index: {}]
  %s3 = inlined_call_operand.vmem [shape: f32[32], index: 3, kind: input, shape index: {}]
  %s4 = inlined_call_operand.<no memory space> [shape: f32[1], index: 4, kind: input, shape index: {}]
  %s5 = inlined_call_operand.hbm [shape: f32[8,128], index: 5, kind: output, shape index: {}]
  %s6 = sld [smem:[#allocation0]]
  $region46: #{tpu_custom_call.1} parent=0
    _
  %s8 = ssub.s32 1, %s6
  %s9 = scalar_select 0, %s8, %s6
  %10 = sst [smem:[#allocation2]] %s4
  $region1: #{tpu_custom_call.1} parent=0
    #allocation3 [shape = 'u8[4096]{0}', space=vmem, size = 0x1000, scoped, tag = 'input window, operand 0, single buffered']
    #allocation4 [shape = 's32[1]{0}', space=sflag, size = 0x4, scoped, tag = 'scoped memory for tpu_custom_call.1']
    #allocation5 [shape = 's32[1]{0}', space=sflag, size = 0x4, scoped, tag = 'scoped memory for tpu_custom_call.1']
    #allocation6 [shape = 's32[1]{0}', space=sflag, size = 0x4, scoped, tag = 'scoped memory for tpu_custom_call.1']
    #allocation7 [shape = 'u8[512]{0}', space=smem, size = 0x200, scoped, tag = 'input window, operand 1, single buffered']
    #allocation8 [shape = 'u8[512]{0}', space=smem, size = 0x200, scoped, tag = 'input window, operand 2, single buffered']
    #allocation9 [shape = 's32[1]{0}', space=sflag, size = 0x4, scoped, tag = 'scoped memory for tpu_custom_call.1']
    #allocation10 [shape = 'u8[512]{0}', space=smem, size = 0x200, scoped, tag = 'input window, operand 3, single buffered']
    #allocation11 [shape = 'u8[4096]{0}', space=vmem, size = 0x1000, scoped, tag = 'output window, operand 0, single buffered']
    %11 = vsyncpa [#allocation4], 0
    %12 = vsyncpa [#allocation6], 0
    %13 = vsyncpa [#allocation9], 0
    %14 = vsyncpa [#allocation5], 0
    // Predicated region
    $region2: #{tpu_custom_call.1} parent=1 // pred_check
      _
    $region3: #{tpu_custom_call.1} parent=1 // pred_check_branch
      %16 = sbr.rel (0) target = $region5
    $region4: #{tpu_custom_call.1} parent=1 // pred_region
      %s18 = ssub.s32 128, 128
      %19 = vsyncadd [#allocation4], %s18
      %s21 = sshll.u32 [#allocation3], 4
      %s22 = int_to_ptr.vmem [resolvable:$true] %s21
      %24 = dma.hbm_to_vmem [thread:$0]  %s0, 128, %s22, [#allocation4]
    $region5: #{tpu_custom_call.1} parent=1 // pred_fallthru
      _
    // Predicated region
    $region6: #{tpu_custom_call.1} parent=1 // pred_check
      _
    $region7: #{tpu_custom_call.1} parent=1 // pred_check_branch
      %26 = sbr.rel (0) target = $region9
    $region8: #{tpu_custom_call.1} parent=1 // pred_region
      %s28 = ssub.s32 16, 16
      %29 = vsyncadd [#allocation6], %s28
      %s31 = sshll.u32 %s1, 4
      %s32 = int_to_ptr.vmem [resolvable:$true] %s31
      %34 = dma.vmem_to_smem %s32, 16, [#allocation7], [#allocation6]
    $region9: #{tpu_custom_call.1} parent=1 // pred_fallthru
      _
    // Predicated region
    $region10: #{tpu_custom_call.1} parent=1 // pred_check
      _
    $region11: #{tpu_custom_call.1} parent=1 // pred_check_branch
      %36 = sbr.rel (0) target = $region13
    $region12: #{tpu_custom_call.1} parent=1 // pred_region
      %s38 = ssub.s32 16, 16
      %39 = vsyncadd [#allocation9], %s38
      %s41 = sshll.u32 %s2, 4
      %s42 = int_to_ptr.vmem [resolvable:$true] %s41
      %44 = dma.vmem_to_smem %s42, 16, [#allocation8], [#allocation9]
    $region13: #{tpu_custom_call.1} parent=1 // pred_fallthru
      _
    // Predicated region
    $region14: #{tpu_custom_call.1} parent=1 // pred_check
      _
    $region15: #{tpu_custom_call.1} parent=1 // pred_check_branch
      %46 = sbr.rel (0) target = $region17
    $region16: #{tpu_custom_call.1} parent=1 // pred_region
      %s48 = ssub.s32 16, 16
      %49 = vsyncadd [#allocation9], %s48
      %s51 = sshll.u32 %s3, 4
      %s52 = int_to_ptr.vmem [resolvable:$true] %s51
      %54 = dma.vmem_to_smem %s52, 16, [#allocation10], [#allocation9]
    $region17: #{tpu_custom_call.1} parent=1 // pred_fallthru
      _
    // Predicated region
    $region18: #{tpu_custom_call.1} parent=1 // pred_check
      _
    $region19: #{tpu_custom_call.1} parent=1 // pred_check_branch
      %56 = sbr.rel (0) target = $region21
    $region20: #{tpu_custom_call.1} parent=1 // pred_region
      _
    $region21: #{tpu_custom_call.1} parent=1 // pred_fallthru
      _
    // Predicated region
    $region22: #{tpu_custom_call.1} parent=1 // pred_check
      _
    $region23: #{tpu_custom_call.1} parent=1 // pred_check_branch
      %58 = sbr.rel (0) target = $region25
    $region24: #{tpu_custom_call.1} parent=1 // pred_region
      %59 = dma.done [#allocation4], 128
    $region25: #{tpu_custom_call.1} parent=1 // pred_fallthru
      _
    // Predicated region
    $region26: #{tpu_custom_call.1} parent=1 // pred_check
      _
    $region27: #{tpu_custom_call.1} parent=1 // pred_check_branch
      %61 = sbr.rel (0) target = $region29
    $region28: #{tpu_custom_call.1} parent=1 // pred_region
      %62 = dma.done [#allocation6], 16
    $region29: #{tpu_custom_call.1} parent=1 // pred_fallthru
      _
    // Predicated region
    $region30: #{tpu_custom_call.1} parent=1 // pred_check
      _
    $region31: #{tpu_custom_call.1} parent=1 // pred_check_branch
      %64 = sbr.rel (0) target = $region33
    $region32: #{tpu_custom_call.1} parent=1 // pred_region
      %65 = dma.done [#allocation9], 16
    $region33: #{tpu_custom_call.1} parent=1 // pred_fallthru
      _
    // Predicated region
    $region34: #{tpu_custom_call.1} parent=1 // pred_check
      _
    $region35: #{tpu_custom_call.1} parent=1 // pred_check_branch
      %67 = sbr.rel (0) target = $region37
    $region36: #{tpu_custom_call.1} parent=1 // pred_region
      %68 = dma.done [#allocation9], 16
    $region37: #{tpu_custom_call.1} parent=1 // pred_fallthru
      _
    %69 = sfence
    %v70 = vld [vmem:[#allocation3] sm:$0xff]
    %s71 = sld [smem:[#allocation2]]
    %v72 = vstv %s71
    %s73 = sld [smem:[#allocation7]]
    %v74 = vstv %s73
    %v75 = vmul.f32 %v70, %v74
    %s76 = sld [smem:[#allocation8]]
    %v77 = vstv %s76
    %v78 = vadd.f32 %v75, %v77
    %v79 = vmax.f32 %v78, 0.0
    %s80 = sld [smem:[#allocation10]]
    %v81 = vstv %s80
    %v82 = vmul.f32 %v79, %v81
    %v83 = vadd.f32 %v72, %v82
    %s84 = sld [smem:[#allocation7 + $0x1]]
    %v85 = vstv %s84
    %v86 = vmul.f32 %v70, %v85
    %s87 = sld [smem:[#allocation8 + $0x1]]
    %v88 = vstv %s87
    %v89 = vadd.f32 %v86, %v88
    %v90 = vmax.f32 %v89, 0.0
    %s91 = sld [smem:[#allocation10 + $0x1]]
    %v92 = vstv %s91
    %v93 = vmul.f32 %v90, %v92
    %v94 = vadd.f32 %v83, %v93
    %s95 = sld [smem:[#allocation7 + $0x2]]
    %v96 = vstv %s95
    %v97 = vmul.f32 %v70, %v96
    %s98 = sld [smem:[#allocation8 + $0x2]]
    %v99 = vstv %s98
    %v100 = vadd.f32 %v97, %v99
    %v101 = vmax.f32 %v100, 0.0
    %s102 = sld [smem:[#allocation10 + $0x2]]
    %v103 = vstv %s102
    %v104 = vmul.f32 %v101, %v103
    %v105 = vadd.f32 %v94, %v104
    %s106 = sld [smem:[#allocation7 + $0x3]]
    %v107 = vstv %s106
    %v108 = vmul.f32 %v70, %v107
    %s109 = sld [smem:[#allocation8 + $0x3]]
    %v110 = vstv %s109
    %v111 = vadd.f32 %v108, %v110
    %v112 = vmax.f32 %v111, 0.0
    %s113 = sld [smem:[#allocation10 + $0x3]]
    %v114 = vstv %s113
    %v115 = vmul.f32 %v112, %v114
    %v116 = vadd.f32 %v105, %v115
    %s117 = sld [smem:[#allocation7 + $0x4]]
    %v118 = vstv %s117
    %v119 = vmul.f32 %v70, %v118
    %s120 = sld [smem:[#allocation8 + $0x4]]
    %v121 = vstv %s120
    %v122 = vadd.f32 %v119, %v121
    %v123 = vmax.f32 %v122, 0.0
    %s124 = sld [smem:[#allocation10 + $0x4]]
    %v125 = vstv %s124
    %v126 = vmul.f32 %v123, %v125
    %v127 = vadd.f32 %v116, %v126
    %s128 = sld [smem:[#allocation7 + $0x5]]
    %v129 = vstv %s128
    %v130 = vmul.f32 %v70, %v129
    %s131 = sld [smem:[#allocation8 + $0x5]]
    %v132 = vstv %s131
    %v133 = vadd.f32 %v130, %v132
    %v134 = vmax.f32 %v133, 0.0
    %s135 = sld [smem:[#allocation10 + $0x5]]
    %v136 = vstv %s135
    %v137 = vmul.f32 %v134, %v136
    %v138 = vadd.f32 %v127, %v137
    %s139 = sld [smem:[#allocation7 + $0x6]]
    %v140 = vstv %s139
    %v141 = vmul.f32 %v70, %v140
    %s142 = sld [smem:[#allocation8 + $0x6]]
    %v143 = vstv %s142
    %v144 = vadd.f32 %v141, %v143
    %v145 = vmax.f32 %v144, 0.0
    %s146 = sld [smem:[#allocation10 + $0x6]]
    %v147 = vstv %s146
    %v148 = vmul.f32 %v145, %v147
    %v149 = vadd.f32 %v138, %v148
    %s150 = sld [smem:[#allocation7 + $0x7]]
    %v151 = vstv %s150
    %v152 = vmul.f32 %v70, %v151
    %s153 = sld [smem:[#allocation8 + $0x7]]
    %v154 = vstv %s153
    %v155 = vadd.f32 %v152, %v154
    %v156 = vmax.f32 %v155, 0.0
    %s157 = sld [smem:[#allocation10 + $0x7]]
    %v158 = vstv %s157
    %v159 = vmul.f32 %v156, %v158
    %v160 = vadd.f32 %v149, %v159
    %s161 = sld [smem:[#allocation7 + $0x8]]
    %v162 = vstv %s161
    %v163 = vmul.f32 %v70, %v162
    %s164 = sld [smem:[#allocation8 + $0x8]]
    %v165 = vstv %s164
    %v166 = vadd.f32 %v163, %v165
    %v167 = vmax.f32 %v166, 0.0
    %s168 = sld [smem:[#allocation10 + $0x8]]
    %v169 = vstv %s168
    %v170 = vmul.f32 %v167, %v169
    %v171 = vadd.f32 %v160, %v170
    %s172 = sld [smem:[#allocation7 + $0x9]]
    %v173 = vstv %s172
    %v174 = vmul.f32 %v70, %v173
    %s175 = sld [smem:[#allocation8 + $0x9]]
    %v176 = vstv %s175
    %v177 = vadd.f32 %v174, %v176
    %v178 = vmax.f32 %v177, 0.0
    %s179 = sld [smem:[#allocation10 + $0x9]]
    %v180 = vstv %s179
    %v181 = vmul.f32 %v178, %v180
    %v182 = vadd.f32 %v171, %v181
    %s183 = sld [smem:[#allocation7 + $0xa]]
    %v184 = vstv %s183
    %v185 = vmul.f32 %v70, %v184
    %s186 = sld [smem:[#allocation8 + $0xa]]
    %v187 = vstv %s186
    %v188 = vadd.f32 %v185, %v187
    %v189 = vmax.f32 %v188, 0.0
    %s190 = sld [smem:[#allocation10 + $0xa]]
    %v191 = vstv %s190
    %v192 = vmul.f32 %v189, %v191
    %v193 = vadd.f32 %v182, %v192
    %s194 = sld [smem:[#allocation7 + $0xb]]
    %v195 = vstv %s194
    %v196 = vmul.f32 %v70, %v195
    %s197 = sld [smem:[#allocation8 + $0xb]]
    %v198 = vstv %s197
    %v199 = vadd.f32 %v196, %v198
    %v200 = vmax.f32 %v199, 0.0
    %s201 = sld [smem:[#allocation10 + $0xb]]
    %v202 = vstv %s201
    %v203 = vmul.f32 %v200, %v202
    %v204 = vadd.f32 %v193, %v203
    %s205 = sld [smem:[#allocation7 + $0xc]]
    %v206 = vstv %s205
    %v207 = vmul.f32 %v70, %v206
    %s208 = sld [smem:[#allocation8 + $0xc]]
    %v209 = vstv %s208
    %v210 = vadd.f32 %v207, %v209
    %v211 = vmax.f32 %v210, 0.0
    %s212 = sld [smem:[#allocation10 + $0xc]]
    %v213 = vstv %s212
    %v214 = vmul.f32 %v211, %v213
    %v215 = vadd.f32 %v204, %v214
    %s216 = sld [smem:[#allocation7 + $0xd]]
    %v217 = vstv %s216
    %v218 = vmul.f32 %v70, %v217
    %s219 = sld [smem:[#allocation8 + $0xd]]
    %v220 = vstv %s219
    %v221 = vadd.f32 %v218, %v220
    %v222 = vmax.f32 %v221, 0.0
    %s223 = sld [smem:[#allocation10 + $0xd]]
    %v224 = vstv %s223
    %v225 = vmul.f32 %v222, %v224
    %v226 = vadd.f32 %v215, %v225
    %s227 = sld [smem:[#allocation7 + $0xe]]
    %v228 = vstv %s227
    %v229 = vmul.f32 %v70, %v228
    %s230 = sld [smem:[#allocation8 + $0xe]]
    %v231 = vstv %s230
    %v232 = vadd.f32 %v229, %v231
    %v233 = vmax.f32 %v232, 0.0
    %s234 = sld [smem:[#allocation10 + $0xe]]
    %v235 = vstv %s234
    %v236 = vmul.f32 %v233, %v235
    %v237 = vadd.f32 %v226, %v236
    %s238 = sld [smem:[#allocation7 + $0xf]]
    %v239 = vstv %s238
    %v240 = vmul.f32 %v70, %v239
    %s241 = sld [smem:[#allocation8 + $0xf]]
    %v242 = vstv %s241
    %v243 = vadd.f32 %v240, %v242
    %v244 = vmax.f32 %v243, 0.0
    %s245 = sld [smem:[#allocation10 + $0xf]]
    %v246 = vstv %s245
    %v247 = vmul.f32 %v244, %v246
    %v248 = vadd.f32 %v237, %v247
    %s249 = sld [smem:[#allocation7 + $0x10]]
    %v250 = vstv %s249
    %v251 = vmul.f32 %v70, %v250
    %s252 = sld [smem:[#allocation8 + $0x10]]
    %v253 = vstv %s252
    %v254 = vadd.f32 %v251, %v253
    %v255 = vmax.f32 %v254, 0.0
    %s256 = sld [smem:[#allocation10 + $0x10]]
    %v257 = vstv %s256
    %v258 = vmul.f32 %v255, %v257
    %v259 = vadd.f32 %v248, %v258
    %s260 = sld [smem:[#allocation7 + $0x11]]
    %v261 = vstv %s260
    %v262 = vmul.f32 %v70, %v261
    %s263 = sld [smem:[#allocation8 + $0x11]]
    %v264 = vstv %s263
    %v265 = vadd.f32 %v262, %v264
    %v266 = vmax.f32 %v265, 0.0
    %s267 = sld [smem:[#allocation10 + $0x11]]
    %v268 = vstv %s267
    %v269 = vmul.f32 %v266, %v268
    %v270 = vadd.f32 %v259, %v269
    %s271 = sld [smem:[#allocation7 + $0x12]]
    %v272 = vstv %s271
    %v273 = vmul.f32 %v70, %v272
    %s274 = sld [smem:[#allocation8 + $0x12]]
    %v275 = vstv %s274
    %v276 = vadd.f32 %v273, %v275
    %v277 = vmax.f32 %v276, 0.0
    %s278 = sld [smem:[#allocation10 + $0x12]]
    %v279 = vstv %s278
    %v280 = vmul.f32 %v277, %v279
    %v281 = vadd.f32 %v270, %v280
    %s282 = sld [smem:[#allocation7 + $0x13]]
    %v283 = vstv %s282
    %v284 = vmul.f32 %v70, %v283
    %s285 = sld [smem:[#allocation8 + $0x13]]
    %v286 = vstv %s285
    %v287 = vadd.f32 %v284, %v286
    %v288 = vmax.f32 %v287, 0.0
    %s289 = sld [smem:[#allocation10 + $0x13]]
    %v290 = vstv %s289
    %v291 = vmul.f32 %v288, %v290
    %v292 = vadd.f32 %v281, %v291
    %s293 = sld [smem:[#allocation7 + $0x14]]
    %v294 = vstv %s293
    %v295 = vmul.f32 %v70, %v294
    %s296 = sld [smem:[#allocation8 + $0x14]]
    %v297 = vstv %s296
    %v298 = vadd.f32 %v295, %v297
    %v299 = vmax.f32 %v298, 0.0
    %s300 = sld [smem:[#allocation10 + $0x14]]
    %v301 = vstv %s300
    %v302 = vmul.f32 %v299, %v301
    %v303 = vadd.f32 %v292, %v302
    %s304 = sld [smem:[#allocation7 + $0x15]]
    %v305 = vstv %s304
    %v306 = vmul.f32 %v70, %v305
    %s307 = sld [smem:[#allocation8 + $0x15]]
    %v308 = vstv %s307
    %v309 = vadd.f32 %v306, %v308
    %v310 = vmax.f32 %v309, 0.0
    %s311 = sld [smem:[#allocation10 + $0x15]]
    %v312 = vstv %s311
    %v313 = vmul.f32 %v310, %v312
    %v314 = vadd.f32 %v303, %v313
    %s315 = sld [smem:[#allocation7 + $0x16]]
    %v316 = vstv %s315
    %v317 = vmul.f32 %v70, %v316
    %s318 = sld [smem:[#allocation8 + $0x16]]
    %v319 = vstv %s318
    %v320 = vadd.f32 %v317, %v319
    %v321 = vmax.f32 %v320, 0.0
    %s322 = sld [smem:[#allocation10 + $0x16]]
    %v323 = vstv %s322
    %v324 = vmul.f32 %v321, %v323
    %v325 = vadd.f32 %v314, %v324
    %s326 = sld [smem:[#allocation7 + $0x17]]
    %v327 = vstv %s326
    %v328 = vmul.f32 %v70, %v327
    %s329 = sld [smem:[#allocation8 + $0x17]]
    %v330 = vstv %s329
    %v331 = vadd.f32 %v328, %v330
    %v332 = vmax.f32 %v331, 0.0
    %s333 = sld [smem:[#allocation10 + $0x17]]
    %v334 = vstv %s333
    %v335 = vmul.f32 %v332, %v334
    %v336 = vadd.f32 %v325, %v335
    %s337 = sld [smem:[#allocation7 + $0x18]]
    %v338 = vstv %s337
    %v339 = vmul.f32 %v70, %v338
    %s340 = sld [smem:[#allocation8 + $0x18]]
    %v341 = vstv %s340
    %v342 = vadd.f32 %v339, %v341
    %v343 = vmax.f32 %v342, 0.0
    %s344 = sld [smem:[#allocation10 + $0x18]]
    %v345 = vstv %s344
    %v346 = vmul.f32 %v343, %v345
    %v347 = vadd.f32 %v336, %v346
    %s348 = sld [smem:[#allocation7 + $0x19]]
    %v349 = vstv %s348
    %v350 = vmul.f32 %v70, %v349
    %s351 = sld [smem:[#allocation8 + $0x19]]
    %v352 = vstv %s351
    %v353 = vadd.f32 %v350, %v352
    %v354 = vmax.f32 %v353, 0.0
    %s355 = sld [smem:[#allocation10 + $0x19]]
    %v356 = vstv %s355
    %v357 = vmul.f32 %v354, %v356
    %v358 = vadd.f32 %v347, %v357
    %s359 = sld [smem:[#allocation7 + $0x1a]]
    %v360 = vstv %s359
    %v361 = vmul.f32 %v70, %v360
    %s362 = sld [smem:[#allocation8 + $0x1a]]
    %v363 = vstv %s362
    %v364 = vadd.f32 %v361, %v363
    %v365 = vmax.f32 %v364, 0.0
    %s366 = sld [smem:[#allocation10 + $0x1a]]
    %v367 = vstv %s366
    %v368 = vmul.f32 %v365, %v367
    %v369 = vadd.f32 %v358, %v368
    %s370 = sld [smem:[#allocation7 + $0x1b]]
    %v371 = vstv %s370
    %v372 = vmul.f32 %v70, %v371
    %s373 = sld [smem:[#allocation8 + $0x1b]]
    %v374 = vstv %s373
    %v375 = vadd.f32 %v372, %v374
    %v376 = vmax.f32 %v375, 0.0
    %s377 = sld [smem:[#allocation10 + $0x1b]]
    %v378 = vstv %s377
    %v379 = vmul.f32 %v376, %v378
    %v380 = vadd.f32 %v369, %v379
    %s381 = sld [smem:[#allocation7 + $0x1c]]
    %v382 = vstv %s381
    %v383 = vmul.f32 %v70, %v382
    %s384 = sld [smem:[#allocation8 + $0x1c]]
    %v385 = vstv %s384
    %v386 = vadd.f32 %v383, %v385
    %v387 = vmax.f32 %v386, 0.0
    %s388 = sld [smem:[#allocation10 + $0x1c]]
    %v389 = vstv %s388
    %v390 = vmul.f32 %v387, %v389
    %v391 = vadd.f32 %v380, %v390
    %s392 = sld [smem:[#allocation7 + $0x1d]]
    %v393 = vstv %s392
    %v394 = vmul.f32 %v70, %v393
    %s395 = sld [smem:[#allocation8 + $0x1d]]
    %v396 = vstv %s395
    %v397 = vadd.f32 %v394, %v396
    %v398 = vmax.f32 %v397, 0.0
    %s399 = sld [smem:[#allocation10 + $0x1d]]
    %v400 = vstv %s399
    %v401 = vmul.f32 %v398, %v400
    %v402 = vadd.f32 %v391, %v401
    %s403 = sld [smem:[#allocation7 + $0x1e]]
    %v404 = vstv %s403
    %v405 = vmul.f32 %v70, %v404
    %s406 = sld [smem:[#allocation8 + $0x1e]]
    %v407 = vstv %s406
    %v408 = vadd.f32 %v405, %v407
    %v409 = vmax.f32 %v408, 0.0
    %s410 = sld [smem:[#allocation10 + $0x1e]]
    %v411 = vstv %s410
    %v412 = vmul.f32 %v409, %v411
    %v413 = vadd.f32 %v402, %v412
    %s414 = sld [smem:[#allocation7 + $0x1f]]
    %v415 = vstv %s414
    %v416 = vmul.f32 %v70, %v415
    %s417 = sld [smem:[#allocation8 + $0x1f]]
    %v418 = vstv %s417
    %v419 = vadd.f32 %v416, %v418
    %v420 = vmax.f32 %v419, 0.0
    %s421 = sld [smem:[#allocation10 + $0x1f]]
    %v422 = vstv %s421
    %v423 = vmul.f32 %v420, %v422
    %v424 = vadd.f32 %v413, %v423
    %425 = vst [vmem:[#allocation11] sm:$0xff] %v424
    // Predicated region
    $region38: #{tpu_custom_call.1} parent=1 // pred_check
      _
    $region39: #{tpu_custom_call.1} parent=1 // pred_check_branch
      %427 = sbr.rel (0) target = $region41
    $region40: #{tpu_custom_call.1} parent=1 // pred_region
      %s429 = ssub.s32 128, 128
      %430 = vsyncadd [#allocation5], %s429
      %s432 = sshll.u32 [#allocation11], 4
      %s433 = int_to_ptr.vmem [resolvable:$true] %s432
      %435 = dma.vmem_to_hbm [thread:$0]  %s433, 128, %s5, [#allocation5]
    $region41: #{tpu_custom_call.1} parent=1 // pred_fallthru
      _
    // Predicated region
    $region42: #{tpu_custom_call.1} parent=1 // pred_check
      _
    $region43: #{tpu_custom_call.1} parent=1 // pred_check_branch
      %437 = sbr.rel (0) target = $region45
    $region44: #{tpu_custom_call.1} parent=1 // pred_region
      %438 = dma.done [#allocation5], 128
    $region45: #{tpu_custom_call.1} parent=1 // pred_fallthru
      _
    %439 = vsyncpa [#allocation4], 1
    %440 = vsyncpa [#allocation5], 1
    %441 = vsyncpa [#allocation6], 1
    %442 = vsyncpa [#allocation9], 1

</llo_original>
